<compile_context>
chip_gen: v7x
topology: tpu7x:2x2x1
jax: 0.10.0
libtpu: 0.0.40
codegen_flags: <defaults>
</compile_context>

<pallas_src>
import functools

import jax
import jax.numpy as jnp
from jax.experimental import pallas as pl
from jax.experimental.pallas import tpu as pltpu

HEAD_PAD = 128  # lane-dense padded width of the fused loc/scale head matmul


def _round_up(a, b):
    return (a + b - 1) // b * b


def decoder_kernel(x_ref, w1x_ref, b1_ref, w2_ref, b2_ref, w3_ref, b3_ref,
                   wh_ref, bh_ref, loc_ref, scale_ref, *, y_dim):
    # Layer 1 (r/z folded into bias): broadcast FMA on the VPU, f32.
    h = x_ref[...] * w1x_ref[...] + b1_ref[...]          # (tile_n, h_dim)
    h = jnp.maximum(h, 0.0)

    # Layer 2: bf16 MXU matmul, f32 accumulation + bias + ReLU.
    h = jnp.dot(h.astype(jnp.bfloat16), w2_ref[...],
                preferred_element_type=jnp.float32) + b2_ref[...]
    h = jnp.maximum(h, 0.0)

    # Layer 3.
    h = jnp.dot(h.astype(jnp.bfloat16), w3_ref[...],
                preferred_element_type=jnp.float32) + b3_ref[...]
    h = jnp.maximum(h, 0.0)

    # Fused loc/scale head (lane-padded to HEAD_PAD columns for the MXU).
    raw = jnp.dot(h.astype(jnp.bfloat16), wh_ref[...],
                  preferred_element_type=jnp.float32) + bh_ref[...]

    # Only the useful lanes leave VMEM: loc raw, scale through 0.1+0.9*softplus.
    loc_ref[...] = raw[:, :y_dim].astype(loc_ref.dtype)
    sp = jnp.logaddexp(raw[:, y_dim:2 * y_dim], 0.0)      # stable softplus
    scale_ref[...] = (0.1 + 0.9 * sp).astype(scale_ref.dtype)


def _choose_tile_n(n):
    """Tile over N: big tiles for throughput, >=2 grid steps once N >= 512."""
    n8 = _round_up(max(n, 1), 8)
    if n8 <= 512:
        return n8                                          # single tile
    # >= 2 steps (v7x megacore), capped at 2048 rows per step.
    return min(2048, _round_up(pl.cdiv(n8, 2), 8))


def decoder_forward(x_target, r, z, params):
    """x_target: (N,) f32, r: (1, r_dim), z: (1, z_dim) -> (loc, scale)."""
    (w1, b1), (w2, b2), (w3, b3), (wloc, bloc), (wscale, bscale) = params
    r_dim = r.shape[1]
    h_dim = w1.shape[1]
    y_dim = wloc.shape[1]
    assert 2 * y_dim <= HEAD_PAD, "fused head assumes 2*y_dim <= 128"

    n = x_target.shape[0]

    # ---- wrapper-side constant folding (f32) -------------------------------
    # The module reshapes x_target to (-1, 1), so layer-1's weight row 0
    # multiplies x and the remaining rows multiply (r, z), which are identical
    # for every target point -> fold them into an effective bias.
    w1_x = w1[0:1, :]                                     # (1, h_dim)
    b1_eff = (b1
              + jnp.dot(r.astype(jnp.float32), w1[1:1 + r_dim, :])
              + jnp.dot(z.astype(jnp.float32), w1[1 + r_dim:, :]))  # (1, h_dim)

    # Fused + lane-padded head weight / bias (loc lanes then scale lanes).
    head_w = jnp.zeros((h_dim, HEAD_PAD), jnp.float32)
    head_w = head_w.at[:, :y_dim].set(wloc).at[:, y_dim:2 * y_dim].set(wscale)
    head_b = jnp.zeros((1, HEAD_PAD), jnp.float32)
    head_b = head_b.at[:, :y_dim].set(bloc).at[:, y_dim:2 * y_dim].set(bscale)

    # bf16 operands for the MXU (accumulation stays f32 in-kernel).
    w2_b = w2.astype(jnp.bfloat16)
    w3_b = w3.astype(jnp.bfloat16)
    head_w_b = head_w.astype(jnp.bfloat16)

    # ---- tiling over N ------------------------------------------------------
    tile_n = _choose_tile_n(n)
    grid = (pl.cdiv(n, tile_n),)                          # ragged tail masked
    x_col = x_target.reshape(-1, 1).astype(jnp.float32)

    resident = lambda i: (0, 0)                           # weights stay resident

    cost = pl.CostEstimate(
        flops=int(2 * n * h_dim * (2 * h_dim + HEAD_PAD + 1)),
        transcendentals=int(2 * n * y_dim),
        bytes_accessed=int(4 * n * (1 + 2 * y_dim)
                           + 2 * h_dim * (2 * h_dim + HEAD_PAD)
                           + 4 * (3 * h_dim + HEAD_PAD)),
    )

    loc, scale = pl.pallas_call(
        functools.partial(decoder_kernel, y_dim=y_dim),
        out_shape=(jax.ShapeDtypeStruct((n, y_dim), jnp.float32),
                   jax.ShapeDtypeStruct((n, y_dim), jnp.float32)),
        grid=grid,
        in_specs=[
            pl.BlockSpec((tile_n, 1), lambda i: (i, 0)),          # x column
            pl.BlockSpec((1, h_dim), resident),                   # w1_x
            pl.BlockSpec((1, h_dim), resident),                   # b1_eff
            pl.BlockSpec((h_dim, h_dim), resident),               # w2 (bf16)
            pl.BlockSpec((1, h_dim), resident),                   # b2
            pl.BlockSpec((h_dim, h_dim), resident),               # w3 (bf16)
            pl.BlockSpec((1, h_dim), resident),                   # b3
            pl.BlockSpec((h_dim, HEAD_PAD), resident),            # fused head W (bf16)
            pl.BlockSpec((1, HEAD_PAD), resident),                # fused head b
        ],
        out_specs=(pl.BlockSpec((tile_n, y_dim), lambda i: (i, 0)),   # loc
                   pl.BlockSpec((tile_n, y_dim), lambda i: (i, 0))),  # scale
        compiler_params=pltpu.CompilerParams(
            dimension_semantics=("parallel",)),
        cost_estimate=cost,
    )(x_col, w1_x, b1_eff, w2_b, b2, w3_b, b3, head_w_b, head_b)

    return loc, scale


def init_linear(key, in_dim, out_dim):
    """Deterministic init mirroring nn.Linear default (uniform ±1/sqrt(fan_in))."""
    kw, kb = jax.random.split(key)
    bound = 1.0 / jnp.sqrt(jnp.float32(in_dim))
    w = jax.random.uniform(kw, (in_dim, out_dim), jnp.float32, -bound, bound)
    b = jax.random.uniform(kb, (1, out_dim), jnp.float32, -bound, bound)
    return w, b


if __name__ == "__main__":
    # Small, module-consistent shapes.
    x_dim, r_dim, z_dim, y_dim = 1, 8, 8, 2
    h_dim = 128
    n_target = 8
    in_dim = x_dim + r_dim + z_dim

    key = jax.random.PRNGKey(0)
    k_x, k_r, k_z, k1, k2, k3, k4, k5 = jax.random.split(key, 8)

    x_target = jax.random.normal(k_x, (n_target,), jnp.float32)
    r = jax.random.normal(k_r, (1, r_dim), jnp.float32)
    z = jax.random.normal(k_z, (1, z_dim), jnp.float32)

    params = (
        init_linear(k1, in_dim, h_dim),   # network.linear_1
        init_linear(k2, h_dim, h_dim),    # network.linear_2
        init_linear(k3, h_dim, h_dim),    # network.linear_3
        init_linear(k4, h_dim, y_dim),    # loc head
        init_linear(k5, h_dim, y_dim),    # scale head
    )

    loc, scale = decoder_forward(x_target, r, z, params)
    jax.block_until_ready((loc, scale))

    # Pure-JAX f32 reference of the original module semantics
    # (concat(x, r.repeat, z.repeat) -> 3x Linear+ReLU -> loc / 0.1+0.9*softplus).
    data_ref = jnp.concatenate(
        [x_target.reshape(-1, 1), jnp.tile(r, (n_target, 1)),
         jnp.tile(z, (n_target, 1))], axis=1)
    h = data_ref
    for (w, b) in params[:3]:
        h = jnp.maximum(h @ w + b, 0.0)
    loc_ref = h @ params[3][0] + params[3][1]
    scale_ref = 0.1 + 0.9 * jnp.logaddexp(h @ params[4][0] + params[4][1], 0.0)

    # Kernel uses bf16 MXU operands with f32 accumulation -> loose tolerance.
    assert jnp.allclose(loc, loc_ref, atol=5e-2, rtol=5e-2), "loc mismatch"
    assert jnp.allclose(scale, scale_ref, atol=5e-2, rtol=5e-2), "scale mismatch"
    assert loc.shape == (n_target, y_dim) and scale.shape == (n_target, y_dim)

    print("KERNEL_OK")
</pallas_src>

<mosaic_0001>
module attributes {stable_mosaic.version = 11 : i64} {
  func.func @decoder_kernel(%arg0: i32, %arg1: memref<8x1xf32, #tpu.memory_space<vmem>>, %arg2: memref<1x128xf32, #tpu.memory_space<vmem>>, %arg3: memref<1x128xf32, #tpu.memory_space<vmem>>, %arg4: memref<128x128xbf16, #tpu.memory_space<vmem>>, %arg5: memref<1x128xf32, #tpu.memory_space<vmem>>, %arg6: memref<128x128xbf16, #tpu.memory_space<vmem>>, %arg7: memref<1x128xf32, #tpu.memory_space<vmem>>, %arg8: memref<128x128xbf16, #tpu.memory_space<vmem>>, %arg9: memref<1x128xf32, #tpu.memory_space<vmem>>, %arg10: memref<8x2xf32, #tpu.memory_space<vmem>>, %arg11: memref<8x2xf32, #tpu.memory_space<vmem>>) attributes {dimension_semantics = [#tpu.dimension_semantics<parallel>], iteration_bounds = array<i64: 1>, scalar_prefetch = 0 : i64, scratch_operands = 0 : i64, tpu.core_type = #tpu.core_type<tc>, window_params = [{transform_indices = @transform_0, window_bounds = array<i64: 8, 1>}, {pipeline_mode = #tpu.pipeline_mode<synchronous>, transform_indices = @transform_1, window_bounds = array<i64: 1, 128>}, {pipeline_mode = #tpu.pipeline_mode<synchronous>, transform_indices = @transform_2, window_bounds = array<i64: 1, 128>}, {pipeline_mode = #tpu.pipeline_mode<synchronous>, transform_indices = @transform_3, window_bounds = array<i64: 128, 128>}, {pipeline_mode = #tpu.pipeline_mode<synchronous>, transform_indices = @transform_4, window_bounds = array<i64: 1, 128>}, {pipeline_mode = #tpu.pipeline_mode<synchronous>, transform_indices = @transform_5, window_bounds = array<i64: 128, 128>}, {pipeline_mode = #tpu.pipeline_mode<synchronous>, transform_indices = @transform_6, window_bounds = array<i64: 1, 128>}, {pipeline_mode = #tpu.pipeline_mode<synchronous>, transform_indices = @transform_7, window_bounds = array<i64: 128, 128>}, {pipeline_mode = #tpu.pipeline_mode<synchronous>, transform_indices = @transform_8, window_bounds = array<i64: 1, 128>}, {transform_indices = @transform_9, window_bounds = array<i64: 8, 2>}, {transform_indices = @transform_10, window_bounds = array<i64: 8, 2>}]} {
    %c0 = arith.constant 0 : index
    %c0_0 = arith.constant 0 : index
    %0 = vector.load %arg1[%c0, %c0_0] : memref<8x1xf32, #tpu.memory_space<vmem>>, vector<8x1xf32>
    %c0_1 = arith.constant 0 : index
    %c0_2 = arith.constant 0 : index
    %1 = vector.load %arg2[%c0_1, %c0_2] : memref<1x128xf32, #tpu.memory_space<vmem>>, vector<1x128xf32>
    %2 = vector.broadcast %0 : vector<8x1xf32> to vector<8x128xf32>
    %3 = vector.broadcast %1 : vector<1x128xf32> to vector<8x128xf32>
    %4 = arith.mulf %2, %3 : vector<8x128xf32>
    %c0_3 = arith.constant 0 : index
    %c0_4 = arith.constant 0 : index
    %5 = vector.load %arg3[%c0_3, %c0_4] : memref<1x128xf32, #tpu.memory_space<vmem>>, vector<1x128xf32>
    %6 = vector.broadcast %5 : vector<1x128xf32> to vector<8x128xf32>
    %7 = arith.addf %4, %6 : vector<8x128xf32>
    %cst = arith.constant 0.000000e+00 : f32
    %8 = vector.broadcast %cst : f32 to vector<8x128xf32>
    %9 = arith.maximumf %7, %8 : vector<8x128xf32>
    %10 = arith.truncf %9 : vector<8x128xf32> to vector<8x128xbf16>
    %c0_5 = arith.constant 0 : index
    %c0_6 = arith.constant 0 : index
    %11 = vector.load %arg4[%c0_5, %c0_6] : memref<128x128xbf16, #tpu.memory_space<vmem>>, vector<128x128xbf16>
    %cst_7 = arith.constant dense<0.000000e+00> : vector<8x128xf32>
    %12 = tpu.matmul %10, %11, %cst_7 {dimension_numbers = #tpu.dot_dimension_numbers<[1], [0], [0], [1], [0, 0, 1, 1], [], []>} : vector<8x128xbf16>, vector<128x128xbf16>, vector<8x128xf32> -> vector<8x128xf32>
    %c0_8 = arith.constant 0 : index
    %c0_9 = arith.constant 0 : index
    %13 = vector.load %arg5[%c0_8, %c0_9] : memref<1x128xf32, #tpu.memory_space<vmem>>, vector<1x128xf32>
    %14 = vector.broadcast %13 : vector<1x128xf32> to vector<8x128xf32>
    %15 = arith.addf %12, %14 : vector<8x128xf32>
    %cst_10 = arith.constant 0.000000e+00 : f32
    %16 = vector.broadcast %cst_10 : f32 to vector<8x128xf32>
    %17 = arith.maximumf %15, %16 : vector<8x128xf32>
    %18 = arith.truncf %17 : vector<8x128xf32> to vector<8x128xbf16>
    %c0_11 = arith.constant 0 : index
    %c0_12 = arith.constant 0 : index
    %19 = vector.load %arg6[%c0_11, %c0_12] : memref<128x128xbf16, #tpu.memory_space<vmem>>, vector<128x128xbf16>
    %cst_13 = arith.constant dense<0.000000e+00> : vector<8x128xf32>
    %20 = tpu.matmul %18, %19, %cst_13 {dimension_numbers = #tpu.dot_dimension_numbers<[1], [0], [0], [1], [0, 0, 1, 1], [], []>} : vector<8x128xbf16>, vector<128x128xbf16>, vector<8x128xf32> -> vector<8x128xf32>
    %c0_14 = arith.constant 0 : index
    %c0_15 = arith.constant 0 : index
    %21 = vector.load %arg7[%c0_14, %c0_15] : memref<1x128xf32, #tpu.memory_space<vmem>>, vector<1x128xf32>
    %22 = vector.broadcast %21 : vector<1x128xf32> to vector<8x128xf32>
    %23 = arith.addf %20, %22 : vector<8x128xf32>
    %cst_16 = arith.constant 0.000000e+00 : f32
    %24 = vector.broadcast %cst_16 : f32 to vector<8x128xf32>
    %25 = arith.maximumf %23, %24 : vector<8x128xf32>
    %26 = arith.truncf %25 : vector<8x128xf32> to vector<8x128xbf16>
    %c0_17 = arith.constant 0 : index
    %c0_18 = arith.constant 0 : index
    %27 = vector.load %arg8[%c0_17, %c0_18] : memref<128x128xbf16, #tpu.memory_space<vmem>>, vector<128x128xbf16>
    %cst_19 = arith.constant dense<0.000000e+00> : vector<8x128xf32>
    %28 = tpu.matmul %26, %27, %cst_19 {dimension_numbers = #tpu.dot_dimension_numbers<[1], [0], [0], [1], [0, 0, 1, 1], [], []>} : vector<8x128xbf16>, vector<128x128xbf16>, vector<8x128xf32> -> vector<8x128xf32>
    %c0_20 = arith.constant 0 : index
    %c0_21 = arith.constant 0 : index
    %29 = vector.load %arg9[%c0_20, %c0_21] : memref<1x128xf32, #tpu.memory_space<vmem>>, vector<1x128xf32>
    %30 = vector.broadcast %29 : vector<1x128xf32> to vector<8x128xf32>
    %31 = arith.addf %28, %30 : vector<8x128xf32>
    %32 = vector.extract_strided_slice %31 {offsets = [0, 0], sizes = [8, 2], strides = [1, 1]} : vector<8x128xf32> to vector<8x2xf32>
    %c0_22 = arith.constant 0 : index
    %c0_23 = arith.constant 0 : index
    %33 = vector.load %arg10[%c0_22, %c0_23] : memref<8x2xf32, #tpu.memory_space<vmem>>, vector<8x2xf32>
    tpu.vector_store %arg10[%c0_22, %c0_23], %32 {strides = array<i32>} : memref<8x2xf32, #tpu.memory_space<vmem>>, vector<8x2xf32>,
    %34 = vector.extract_strided_slice %31 {offsets = [0, 2], sizes = [8, 2], strides = [1, 1]} : vector<8x128xf32> to vector<8x2xf32>
    %cst_24 = arith.constant 0.000000e+00 : f32
    %35 = vector.broadcast %cst_24 : f32 to vector<8x2xf32>
    %36 = arith.maximumf %34, %35 : vector<8x2xf32>
    %37 = vector.broadcast %cst_24 : f32 to vector<8x2xf32>
    %38 = arith.subf %34, %37 : vector<8x2xf32>
    %39 = arith.cmpf one, %38, %38 : vector<8x2xf32>
    %40 = vector.broadcast %cst_24 : f32 to vector<8x2xf32>
    %41 = arith.addf %34, %40 : vector<8x2xf32>
    %42 = math.absf %38 : vector<8x2xf32>
    %cst_25 = arith.constant 0.000000e+00 : f32
    %43 = vector.broadcast %cst_25 : f32 to vector<8x2xf32>
    %44 = arith.subf %43, %42 : vector<8x2xf32>
    %45 = math.exp %44 : vector<8x2xf32>
    %46 = math.log1p %45 : vector<8x2xf32>
    %47 = arith.addf %36, %46 : vector<8x2xf32>
    %48 = arith.select %39, %41, %47 : vector<8x2xi1>, vector<8x2xf32>
    %cst_26 = arith.constant 0.899999976 : f32
    %49 = vector.broadcast %cst_26 : f32 to vector<8x2xf32>
    %50 = arith.mulf %49, %48 : vector<8x2xf32>
    %cst_27 = arith.constant 1.000000e-01 : f32
    %51 = vector.broadcast %cst_27 : f32 to vector<8x2xf32>
    %52 = arith.addf %51, %50 : vector<8x2xf32>
    %c0_28 = arith.constant 0 : index
    %c0_29 = arith.constant 0 : index
    %53 = vector.load %arg11[%c0_28, %c0_29] : memref<8x2xf32, #tpu.memory_space<vmem>>, vector<8x2xf32>
    tpu.vector_store %arg11[%c0_28, %c0_29], %52 {strides = array<i32>} : memref<8x2xf32, #tpu.memory_space<vmem>>, vector<8x2xf32>,
    return
  }
  func.func @transform_0(%arg0: i32) -> (i32, i32) {
    %c0_i32 = arith.constant 0 : i32
    %c0_i32_0 = arith.constant 0 : i32
    return %arg0, %c0_i32 : i32, i32
  }
  func.func @transform_1(%arg0: i32) -> (i32, i32) {
    %c0_i32 = arith.constant 0 : i32
    %c0_i32_0 = arith.constant 0 : i32
    %c0_i32_1 = arith.constant 0 : i32
    return %c0_i32, %c0_i32_0 : i32, i32
  }
  func.func @transform_2(%arg0: i32) -> (i32, i32) {
    %c0_i32 = arith.constant 0 : i32
    %c0_i32_0 = arith.constant 0 : i32
    %c0_i32_1 = arith.constant 0 : i32
    return %c0_i32, %c0_i32_0 : i32, i32
  }
  func.func @transform_3(%arg0: i32) -> (i32, i32) {
    %c0_i32 = arith.constant 0 : i32
    %c0_i32_0 = arith.constant 0 : i32
    %c0_i32_1 = arith.constant 0 : i32
    return %c0_i32, %c0_i32_0 : i32, i32
  }
  func.func @transform_4(%arg0: i32) -> (i32, i32) {
    %c0_i32 = arith.constant 0 : i32
    %c0_i32_0 = arith.constant 0 : i32
    %c0_i32_1 = arith.constant 0 : i32
    return %c0_i32, %c0_i32_0 : i32, i32
  }
  func.func @transform_5(%arg0: i32) -> (i32, i32) {
    %c0_i32 = arith.constant 0 : i32
    %c0_i32_0 = arith.constant 0 : i32
    %c0_i32_1 = arith.constant 0 : i32
    return %c0_i32, %c0_i32_0 : i32, i32
  }
  func.func @transform_6(%arg0: i32) -> (i32, i32) {
    %c0_i32 = arith.constant 0 : i32
    %c0_i32_0 = arith.constant 0 : i32
    %c0_i32_1 = arith.constant 0 : i32
    return %c0_i32, %c0_i32_0 : i32, i32
  }
  func.func @transform_7(%arg0: i32) -> (i32, i32) {
    %c0_i32 = arith.constant 0 : i32
    %c0_i32_0 = arith.constant 0 : i32
    %c0_i32_1 = arith.constant 0 : i32
    return %c0_i32, %c0_i32_0 : i32, i32
  }
  func.func @transform_8(%arg0: i32) -> (i32, i32) {
    %c0_i32 = arith.constant 0 : i32
    %c0_i32_0 = arith.constant 0 : i32
    %c0_i32_1 = arith.constant 0 : i32
    return %c0_i32, %c0_i32_0 : i32, i32
  }
  func.func @transform_9(%arg0: i32) -> (i32, i32) {
    %c0_i32 = arith.constant 0 : i32
    %c0_i32_0 = arith.constant 0 : i32
    return %arg0, %c0_i32 : i32, i32
  }
  func.func @transform_10(%arg0: i32) -> (i32, i32) {
    %c0_i32 = arith.constant 0 : i32
    %c0_i32_0 = arith.constant 0 : i32
    return %arg0, %c0_i32 : i32, i32
  }
}

</mosaic_0001>

<llo_original>
// kernel: tpu_custom_call.1
$region0: #{tpu_custom_call.1}
  #allocation0 [shape = 'u32[]', space=smem, size = 0x4, offset = 0x4, fixed_abs, tag = 'smem constant byte address 0x4 - core index']
  #allocation1 [shape = 'u32[144,128]{1,0:T(1,128)}', space=vmem, size = 0x12000, scoped, tag = 'internal scratch']
  %s0 = inlined_call_operand.vmem [shape: f32[8,1], index: 0, kind: input, shape index: {}]
  %s1 = inlined_call_operand.vmem [shape: f32[1,128], index: 1, kind: input, shape index: {}]
  %s2 = inlined_call_operand.vmem [shape: f32[1,128], index: 2, kind: input, shape index: {}]
  %s3 = inlined_call_operand.hbm [shape: bf16[128,128], index: 3, kind: input, shape index: {}]
  %s4 = inlined_call_operand.vmem [shape: f32[1,128], index: 4, kind: input, shape index: {}]
  %s5 = inlined_call_operand.hbm [shape: bf16[128,128], index: 5, kind: input, shape index: {}]
  %s6 = inlined_call_operand.vmem [shape: f32[1,128], index: 6, kind: input, shape index: {}]
  %s7 = inlined_call_operand.hbm [shape: bf16[128,128], index: 7, kind: input, shape index: {}]
  %s8 = inlined_call_operand.vmem [shape: f32[1,128], index: 8, kind: input, shape index: {}]
  %s9 = inlined_call_operand.vmem [shape: f32[8,2], index: 9, kind: output, shape index: {0}]
  %s10 = inlined_call_operand.vmem [shape: f32[8,2], index: 10, kind: output, shape index: {1}]
  %11 = xla_tuple %s9, %s10
  %s12 = sld [smem:[#allocation0]]
  $region66: #{tpu_custom_call.1} parent=0
    _
  %s14 = ssub.s32 1, %s12
  %s15 = scalar_select 0, %s14, %s12
  $region1: #{tpu_custom_call.1} parent=0
    #allocation2 [shape = 'u8[32768]{0}', space=vmem, size = 0x8000, scoped, tag = 'input window, operand 3, single buffered']
    #allocation3 [shape = 's32[1]{0}', space=sflag, size = 0x4, scoped, tag = 'scoped memory for tpu_custom_call.1']
    #allocation4 [shape = 'u8[32768]{0}', space=vmem, size = 0x8000, scoped, tag = 'input window, operand 5, single buffered']
    #allocation5 [shape = 's32[1]{0}', space=sflag, size = 0x4, scoped, tag = 'scoped memory for tpu_custom_call.1']
    #allocation6 [shape = 'u8[32768]{0}', space=vmem, size = 0x8000, scoped, tag = 'input window, operand 7, single buffered']
    %16 = vsyncpa [#allocation3], 0
    %17 = vsyncpa [#allocation5], 0
    // Predicated region
    $region2: #{tpu_custom_call.1} parent=1 // pred_check
      _
    $region3: #{tpu_custom_call.1} parent=1 // pred_check_branch
      %19 = sbr.rel (0) target = $region5
    $region4: #{tpu_custom_call.1} parent=1 // pred_region
      _
    $region5: #{tpu_custom_call.1} parent=1 // pred_fallthru
      _
    // Predicated region
    $region6: #{tpu_custom_call.1} parent=1 // pred_check
      _
    $region7: #{tpu_custom_call.1} parent=1 // pred_check_branch
      %21 = sbr.rel (0) target = $region9
    $region8: #{tpu_custom_call.1} parent=1 // pred_region
      _
    $region9: #{tpu_custom_call.1} parent=1 // pred_fallthru
      _
    // Predicated region
    $region10: #{tpu_custom_call.1} parent=1 // pred_check
      _
    $region11: #{tpu_custom_call.1} parent=1 // pred_check_branch
      %23 = sbr.rel (0) target = $region13
    $region12: #{tpu_custom_call.1} parent=1 // pred_region
      _
    $region13: #{tpu_custom_call.1} parent=1 // pred_fallthru
      _
    // Predicated region
    $region14: #{tpu_custom_call.1} parent=1 // pred_check
      _
    $region15: #{tpu_custom_call.1} parent=1 // pred_check_branch
      %25 = sbr.rel (0) target = $region17
    $region16: #{tpu_custom_call.1} parent=1 // pred_region
      %s27 = ssub.s32 1024, 1024
      %28 = vsyncadd [#allocation3], %s27
      %s29 = sshll.u32 [#allocation2], 4
      %s30 = int_to_ptr.vmem [resolvable:$true] %s29
      %35 = dma.hbm_to_vmem [thread:$0]  %s3, 1024, %s30, [#allocation3], 64, 64, 4
    $region17: #{tpu_custom_call.1} parent=1 // pred_fallthru
      _
    // Predicated region
    $region18: #{tpu_custom_call.1} parent=1 // pred_check
      _
    $region19: #{tpu_custom_call.1} parent=1 // pred_check_branch
      %37 = sbr.rel (0) target = $region21
    $region20: #{tpu_custom_call.1} parent=1 // pred_region
      _
    $region21: #{tpu_custom_call.1} parent=1 // pred_fallthru
      _
    // Predicated region
    $region22: #{tpu_custom_call.1} parent=1 // pred_check
      _
    $region23: #{tpu_custom_call.1} parent=1 // pred_check_branch
      %39 = sbr.rel (0) target = $region25
    $region24: #{tpu_custom_call.1} parent=1 // pred_region
      %s41 = ssub.s32 1024, 1024
      %42 = vsyncadd [#allocation5], %s41
      %s43 = sshll.u32 [#allocation4], 4
      %s44 = int_to_ptr.vmem [resolvable:$true] %s43
      %49 = dma.hbm_to_vmem [thread:$0]  %s5, 1024, %s44, [#allocation5], 64, 64, 4
    $region25: #{tpu_custom_call.1} parent=1 // pred_fallthru
      _
    // Predicated region
    $region26: #{tpu_custom_call.1} parent=1 // pred_check
      _
    $region27: #{tpu_custom_call.1} parent=1 // pred_check_branch
      %51 = sbr.rel (0) target = $region29
    $region28: #{tpu_custom_call.1} parent=1 // pred_region
      _
    $region29: #{tpu_custom_call.1} parent=1 // pred_fallthru
      _
    // Predicated region
    $region30: #{tpu_custom_call.1} parent=1 // pred_check
      _
    $region31: #{tpu_custom_call.1} parent=1 // pred_check_branch
      %53 = sbr.rel (0) target = $region33
    $region32: #{tpu_custom_call.1} parent=1 // pred_region
      %s55 = ssub.s32 1024, 1024
      %56 = vsyncadd [#allocation5], %s55
      %s57 = sshll.u32 [#allocation6], 4
      %s58 = int_to_ptr.vmem [resolvable:$true] %s57
      %63 = dma.hbm_to_vmem [thread:$0]  %s7, 1024, %s58, [#allocation5], 64, 64, 4
    $region33: #{tpu_custom_call.1} parent=1 // pred_fallthru
      _
    // Predicated region
    $region34: #{tpu_custom_call.1} parent=1 // pred_check
      _
    $region35: #{tpu_custom_call.1} parent=1 // pred_check_branch
      %65 = sbr.rel (0) target = $region37
    $region36: #{tpu_custom_call.1} parent=1 // pred_region
      _
    $region37: #{tpu_custom_call.1} parent=1 // pred_fallthru
      _
    // Predicated region
    $region38: #{tpu_custom_call.1} parent=1 // pred_check
      _
    $region39: #{tpu_custom_call.1} parent=1 // pred_check_branch
      %67 = sbr.rel (0) target = $region41
    $region40: #{tpu_custom_call.1} parent=1 // pred_region
      %68 = dma.done [#allocation3], 1024
    $region41: #{tpu_custom_call.1} parent=1 // pred_fallthru
      _
    // Predicated region
    $region42: #{tpu_custom_call.1} parent=1 // pred_check
      _
    $region43: #{tpu_custom_call.1} parent=1 // pred_check_branch
      %70 = sbr.rel (0) target = $region45
    $region44: #{tpu_custom_call.1} parent=1 // pred_region
      %71 = dma.done [#allocation5], 1024
    $region45: #{tpu_custom_call.1} parent=1 // pred_fallthru
      _
    // Predicated region
    $region46: #{tpu_custom_call.1} parent=1 // pred_check
      _
    $region47: #{tpu_custom_call.1} parent=1 // pred_check_branch
      %73 = sbr.rel (0) target = $region49
    $region48: #{tpu_custom_call.1} parent=1 // pred_region
      %74 = dma.done [#allocation5], 1024
    $region49: #{tpu_custom_call.1} parent=1 // pred_fallthru
      _
    %v76 = vld [vmem:[%s0] sm:$0xff]
    %v77 = vld [vmem:[%s1] sm:$0x1]
    %79 = vset.pattern.permute.xlu0 0
    %80 = vperm.xlu0 %79, %v76
    %v81 = vpop.permute.xlu0 %80
    %v84 = vlaneseq
    %v85 = vshrl.u32 %v84, 7
    %v86 = vsub.s32 0, %v85
    %v87 = vrot.slane %v77, %v86
    %v89 = vmul.f32 %v81, %v87
    %v90 = vld [vmem:[%s2] sm:$0x1]
    %v92 = vlaneseq
    %v93 = vshrl.u32 %v92, 7
    %v94 = vsub.s32 0, %v93
    %v95 = vrot.slane %v90, %v94
    %v97 = vadd.f32 %v89, %v95
    %v98 = vmax.f32 %v97, 0.0
    %v99 = vpack.c.bf16 %v98, %v98
    %v100 = vld [vmem:[#allocation2] sm:$0xf]
    %v101 = vld [vmem:[#allocation2 + $0x4] sm:$0xf]
    %v102 = vld [vmem:[#allocation2 + $0x8] sm:$0xf]
    %v103 = vld [vmem:[#allocation2 + $0xc] sm:$0xf]
    %v104 = vld [vmem:[#allocation2 + $0x10] sm:$0xf]
    %v105 = vld [vmem:[#allocation2 + $0x14] sm:$0xf]
    %v106 = vld [vmem:[#allocation2 + $0x18] sm:$0xf]
    %v107 = vld [vmem:[#allocation2 + $0x1c] sm:$0xf]
    %v108 = vld [vmem:[#allocation2 + $0x20] sm:$0xf]
    %v109 = vld [vmem:[#allocation2 + $0x24] sm:$0xf]
    %v110 = vld [vmem:[#allocation2 + $0x28] sm:$0xf]
    %v111 = vld [vmem:[#allocation2 + $0x2c] sm:$0xf]
    %v112 = vld [vmem:[#allocation2 + $0x30] sm:$0xf]
    %v113 = vld [vmem:[#allocation2 + $0x34] sm:$0xf]
    %v114 = vld [vmem:[#allocation2 + $0x38] sm:$0xf]
    %v115 = vld [vmem:[#allocation2 + $0x3c] sm:$0xf]
    %v116 = vld [vmem:[%s4] sm:$0x1]
    %v118 = vlaneseq
    %v119 = vshrl.u32 %v118, 7
    %v120 = vsub.s32 0, %v119
    %v121 = vrot.slane %v116, %v120
    %v139 = vunpack.c.l.b16 %v100
    %v140 = vunpack.c.l.b16 %v101
    %v141 = vunpack.c.l.b16 %v102
    %v142 = vunpack.c.l.b16 %v103
    %v143 = vunpack.c.l.b16 %v104
    %v144 = vunpack.c.l.b16 %v105
    %v145 = vunpack.c.l.b16 %v106
    %v146 = vunpack.c.l.b16 %v107
    %v147 = vunpack.c.l.b16 %v108
    %v148 = vunpack.c.l.b16 %v109
    %v149 = vunpack.c.l.b16 %v110
    %v150 = vunpack.c.l.b16 %v111
    %v151 = vunpack.c.l.b16 %v112
    %v152 = vunpack.c.l.b16 %v113
    %v153 = vunpack.c.l.b16 %v114
    %v154 = vunpack.c.l.b16 %v115
    %v155 = vpack.c.b16 %v140, %v139
    %v156 = vpack.c.b16 %v142, %v141
    %v157 = vpack.c.b16 %v144, %v143
    %v158 = vpack.c.b16 %v146, %v145
    %v159 = vpack.c.b16 %v148, %v147
    %v160 = vpack.c.b16 %v150, %v149
    %v161 = vpack.c.b16 %v152, %v151
    %v162 = vpack.c.b16 %v154, %v153
    %171 = vmatprep.subr.bf16.mxu0 0
    %172 = vmatpush1.bf16.msra.mxu0 %v155
    %173 = vmatprep.subr.bf16.mxu0 0
    %174 = vmatpush1.bf16.msra.mxu0 %v156
    %175 = vmatprep.subr.bf16.mxu0 0
    %176 = vmatpush1.bf16.msra.mxu0 %v157
    %177 = vmatprep.subr.bf16.mxu0 0
    %178 = vmatpush1.bf16.msra.mxu0 %v158
    %179 = vmatprep.subr.bf16.mxu0 0
    %180 = vmatpush1.bf16.msra.mxu0 %v159
    %181 = vmatprep.subr.bf16.mxu0 0
    %182 = vmatpush1.bf16.msra.mxu0 %v160
    %183 = vmatprep.subr.bf16.mxu0 0
    %184 = vmatpush1.bf16.msra.mxu0 %v161
    %185 = vmatprep.subr.bf16.mxu0 0
    %186 = vmatpush1.bf16.msra.mxu0 %v162
    %187 = vmatprep.subr.bf16.mxu0 0
    %188 = vmatpush1.bf16.msra.mxu0 0
    %189 = vmatprep.subr.bf16.mxu0 0
    %190 = vmatpush1.bf16.msra.mxu0 0
    %191 = vmatprep.subr.bf16.mxu0 0
    %192 = vmatpush1.bf16.msra.mxu0 0
    %193 = vmatprep.subr.bf16.mxu0 0
    %194 = vmatpush1.bf16.msra.mxu0 0
    %195 = vmatprep.subr.bf16.mxu0 0
    %196 = vmatpush1.bf16.msra.mxu0 0
    %197 = vmatprep.subr.bf16.mxu0 0
    %198 = vmatpush1.bf16.msra.mxu0 0
    %199 = vmatprep.subr.bf16.mxu0 0
    %200 = vmatpush1.bf16.msra.mxu0 0
    %201 = vmatprep.subr.bf16.mxu0 0
    %202 = vmatpush1.bf16.msra.mxu0 0
    %203 = vmatprep.mubr.bf16.mxu0 0
    %204 = vmatmul.mubr.bf16.gmra.mrb[0].mxu0 %v99
    %v205 = vpop.f32.mrb[0].mxu0
    %v206 = vadd.f32 %v121, %v205
    %v207 = vpop.f32.mrb[0].mxu0
    %v208 = vpop.f32.mrb[0].mxu0
    %v209 = vpop.f32.mrb[0].mxu0
    %210 = vdwg.mxu0
    %v211 = vmax.f32 %v206, 0.0
    %v212 = vpack.c.bf16 %v211, %v211
    %v213 = vld [vmem:[#allocation4] sm:$0xf]
    %v214 = vld [vmem:[#allocation4 + $0x4] sm:$0xf]
    %v215 = vld [vmem:[#allocation4 + $0x8] sm:$0xf]
    %v216 = vld [vmem:[#allocation4 + $0xc] sm:$0xf]
    %v217 = vld [vmem:[#allocation4 + $0x10] sm:$0xf]
    %v218 = vld [vmem:[#allocation4 + $0x14] sm:$0xf]
    %v219 = vld [vmem:[#allocation4 + $0x18] sm:$0xf]
    %v220 = vld [vmem:[#allocation4 + $0x1c] sm:$0xf]
    %v221 = vld [vmem:[#allocation4 + $0x20] sm:$0xf]
    %v222 = vld [vmem:[#allocation4 + $0x24] sm:$0xf]
    %v223 = vld [vmem:[#allocation4 + $0x28] sm:$0xf]
    %v224 = vld [vmem:[#allocation4 + $0x2c] sm:$0xf]
    %v225 = vld [vmem:[#allocation4 + $0x30] sm:$0xf]
    %v226 = vld [vmem:[#allocation4 + $0x34] sm:$0xf]
    %v227 = vld [vmem:[#allocation4 + $0x38] sm:$0xf]
    %v228 = vld [vmem:[#allocation4 + $0x3c] sm:$0xf]
    %v229 = vld [vmem:[%s6] sm:$0x1]
    %v231 = vlaneseq
    %v232 = vshrl.u32 %v231, 7
    %v233 = vsub.s32 0, %v232
    %v234 = vrot.slane %v229, %v233
    %v252 = vunpack.c.l.b16 %v213
    %v253 = vunpack.c.l.b16 %v214
    %v254 = vunpack.c.l.b16 %v215
    %v255 = vunpack.c.l.b16 %v216
    %v256 = vunpack.c.l.b16 %v217
    %v257 = vunpack.c.l.b16 %v218
    %v258 = vunpack.c.l.b16 %v219
    %v259 = vunpack.c.l.b16 %v220
    %v260 = vunpack.c.l.b16 %v221
    %v261 = vunpack.c.l.b16 %v222
    %v262 = vunpack.c.l.b16 %v223
    %v263 = vunpack.c.l.b16 %v224
    %v264 = vunpack.c.l.b16 %v225
    %v265 = vunpack.c.l.b16 %v226
    %v266 = vunpack.c.l.b16 %v227
    %v267 = vunpack.c.l.b16 %v228
    %v268 = vpack.c.b16 %v253, %v252
    %v269 = vpack.c.b16 %v255, %v254
    %v270 = vpack.c.b16 %v257, %v256
    %v271 = vpack.c.b16 %v259, %v258
    %v272 = vpack.c.b16 %v261, %v260
    %v273 = vpack.c.b16 %v263, %v262
    %v274 = vpack.c.b16 %v265, %v264
    %v275 = vpack.c.b16 %v267, %v266
    %284 = vmatprep.subr.bf16.mxu0 0
    %285 = vmatpush1.bf16.msra.mxu0 %v268
    %286 = vmatprep.subr.bf16.mxu0 0
    %287 = vmatpush1.bf16.msra.mxu0 %v269
    %288 = vmatprep.subr.bf16.mxu0 0
    %289 = vmatpush1.bf16.msra.mxu0 %v270
    %290 = vmatprep.subr.bf16.mxu0 0
    %291 = vmatpush1.bf16.msra.mxu0 %v271
    %292 = vmatprep.subr.bf16.mxu0 0
    %293 = vmatpush1.bf16.msra.mxu0 %v272
    %294 = vmatprep.subr.bf16.mxu0 0
    %295 = vmatpush1.bf16.msra.mxu0 %v273
    %296 = vmatprep.subr.bf16.mxu0 0
    %297 = vmatpush1.bf16.msra.mxu0 %v274
    %298 = vmatprep.subr.bf16.mxu0 0
    %299 = vmatpush1.bf16.msra.mxu0 %v275
    %300 = vmatprep.subr.bf16.mxu0 0
    %301 = vmatpush1.bf16.msra.mxu0 0
    %302 = vmatprep.subr.bf16.mxu0 0
    %303 = vmatpush1.bf16.msra.mxu0 0
    %304 = vmatprep.subr.bf16.mxu0 0
    %305 = vmatpush1.bf16.msra.mxu0 0
    %306 = vmatprep.subr.bf16.mxu0 0
    %307 = vmatpush1.bf16.msra.mxu0 0
    %308 = vmatprep.subr.bf16.mxu0 0
    %309 = vmatpush1.bf16.msra.mxu0 0
    %310 = vmatprep.subr.bf16.mxu0 0
    %311 = vmatpush1.bf16.msra.mxu0 0
    %312 = vmatprep.subr.bf16.mxu0 0
    %313 = vmatpush1.bf16.msra.mxu0 0
    %314 = vmatprep.subr.bf16.mxu0 0
    %315 = vmatpush1.bf16.msra.mxu0 0
    %316 = vmatprep.mubr.bf16.mxu0 0
    %317 = vmatmul.mubr.bf16.gmra.mrb[0].mxu0 %v212
    %v318 = vpop.f32.mrb[0].mxu0
    %v319 = vadd.f32 %v234, %v318
    %v320 = vpop.f32.mrb[0].mxu0
    %v321 = vpop.f32.mrb[0].mxu0
    %v322 = vpop.f32.mrb[0].mxu0
    %323 = vdwg.mxu0
    %v324 = vmax.f32 %v319, 0.0
    %v325 = vpack.c.bf16 %v324, %v324
    %v326 = vld [vmem:[#allocation6] sm:$0xf]
    %v327 = vld [vmem:[#allocation6 + $0x4] sm:$0xf]
    %v328 = vld [vmem:[#allocation6 + $0x8] sm:$0xf]
    %v329 = vld [vmem:[#allocation6 + $0xc] sm:$0xf]
    %v330 = vld [vmem:[#allocation6 + $0x10] sm:$0xf]
    %v331 = vld [vmem:[#allocation6 + $0x14] sm:$0xf]
    %v332 = vld [vmem:[#allocation6 + $0x18] sm:$0xf]
    %v333 = vld [vmem:[#allocation6 + $0x1c] sm:$0xf]
    %v334 = vld [vmem:[#allocation6 + $0x20] sm:$0xf]
    %v335 = vld [vmem:[#allocation6 + $0x24] sm:$0xf]
    %v336 = vld [vmem:[#allocation6 + $0x28] sm:$0xf]
    %v337 = vld [vmem:[#allocation6 + $0x2c] sm:$0xf]
    %v338 = vld [vmem:[#allocation6 + $0x30] sm:$0xf]
    %v339 = vld [vmem:[#allocation6 + $0x34] sm:$0xf]
    %v340 = vld [vmem:[#allocation6 + $0x38] sm:$0xf]
    %v341 = vld [vmem:[#allocation6 + $0x3c] sm:$0xf]
    %v342 = vld [vmem:[%s8] sm:$0x1]
    %v344 = vlaneseq
    %v345 = vshrl.u32 %v344, 7
    %v346 = vsub.s32 0, %v345
    %v347 = vrot.slane %v342, %v346
    %v365 = vunpack.c.l.b16 %v326
    %v366 = vunpack.c.l.b16 %v327
    %v367 = vunpack.c.l.b16 %v328
    %v368 = vunpack.c.l.b16 %v329
    %v369 = vunpack.c.l.b16 %v330
    %v370 = vunpack.c.l.b16 %v331
    %v371 = vunpack.c.l.b16 %v332
    %v372 = vunpack.c.l.b16 %v333
    %v373 = vunpack.c.l.b16 %v334
    %v374 = vunpack.c.l.b16 %v335
    %v375 = vunpack.c.l.b16 %v336
    %v376 = vunpack.c.l.b16 %v337
    %v377 = vunpack.c.l.b16 %v338
    %v378 = vunpack.c.l.b16 %v339
    %v379 = vunpack.c.l.b16 %v340
    %v380 = vunpack.c.l.b16 %v341
    %v381 = vpack.c.b16 %v366, %v365
    %v382 = vpack.c.b16 %v368, %v367
    %v383 = vpack.c.b16 %v370, %v369
    %v384 = vpack.c.b16 %v372, %v371
    %v385 = vpack.c.b16 %v374, %v373
    %v386 = vpack.c.b16 %v376, %v375
    %v387 = vpack.c.b16 %v378, %v377
    %v388 = vpack.c.b16 %v380, %v379
    %397 = vmatprep.subr.bf16.mxu0 0
    %398 = vmatpush1.bf16.msra.mxu0 %v381
    %399 = vmatprep.subr.bf16.mxu0 0
    %400 = vmatpush1.bf16.msra.mxu0 %v382
    %401 = vmatprep.subr.bf16.mxu0 0
    %402 = vmatpush1.bf16.msra.mxu0 %v383
    %403 = vmatprep.subr.bf16.mxu0 0
    %404 = vmatpush1.bf16.msra.mxu0 %v384
    %405 = vmatprep.subr.bf16.mxu0 0
    %406 = vmatpush1.bf16.msra.mxu0 %v385
    %407 = vmatprep.subr.bf16.mxu0 0
    %408 = vmatpush1.bf16.msra.mxu0 %v386
    %409 = vmatprep.subr.bf16.mxu0 0
    %410 = vmatpush1.bf16.msra.mxu0 %v387
    %411 = vmatprep.subr.bf16.mxu0 0
    %412 = vmatpush1.bf16.msra.mxu0 %v388
    %413 = vmatprep.subr.bf16.mxu0 0
    %414 = vmatpush1.bf16.msra.mxu0 0
    %415 = vmatprep.subr.bf16.mxu0 0
    %416 = vmatpush1.bf16.msra.mxu0 0
    %417 = vmatprep.subr.bf16.mxu0 0
    %418 = vmatpush1.bf16.msra.mxu0 0
    %419 = vmatprep.subr.bf16.mxu0 0
    %420 = vmatpush1.bf16.msra.mxu0 0
    %421 = vmatprep.subr.bf16.mxu0 0
    %422 = vmatpush1.bf16.msra.mxu0 0
    %423 = vmatprep.subr.bf16.mxu0 0
    %424 = vmatpush1.bf16.msra.mxu0 0
    %425 = vmatprep.subr.bf16.mxu0 0
    %426 = vmatpush1.bf16.msra.mxu0 0
    %427 = vmatprep.subr.bf16.mxu0 0
    %428 = vmatpush1.bf16.msra.mxu0 0
    %429 = vmatprep.mubr.bf16.mxu0 0
    %430 = vmatmul.mubr.bf16.gmra.mrb[0].mxu0 %v325
    %v431 = vpop.f32.mrb[0].mxu0
    %v432 = vadd.f32 %v347, %v431
    %v433 = vpop.f32.mrb[0].mxu0
    %v434 = vpop.f32.mrb[0].mxu0
    %v435 = vpop.f32.mrb[0].mxu0
    %436 = vdwg.mxu0
    %vm437 = vcmask 15360
    %438 = vst.msk [vmem:[%s9] sm:$0xff] %vm437, %v432
    %v439 = vmax.f32 %v432, 0.0
    %vm440 = vcmp.ne.f32.partialorder %v432, %v432
    %v441 = vadd.f32 %v432, 0.0
    %v442 = vand.u32 2147483647, %v432
    %v443 = vsub.f32 0.0, %v442
    %v444 = vmul.f32 %v443, 1.442695
    %v445 = vpow.pop %v444
    %v446 = vadd.f32 %v445, 1.0
    %v447 = vlog2.pop %v446
    %v448 = vmul.f32 %v447, 0.6931472
    %v449 = vmul.f32 -0.5, %v445
    %v450 = vadd.f32 %v449, 1.0
    %v451 = vmul.f32 %v450, %v445
    %v452 = vand.u32 2147483647, %v445
    %vm453 = vcmp.lt.f32.partialorder %v452, 0.0004427343
    %v454 = vsel %vm453, %v451, %v448
    %v455 = vadd.f32 %v439, %v454
    %v456 = vsel %vm440, %v441, %v455
    %v457 = vmul.f32 %v456, 0.9
    %v458 = vadd.f32 %v457, 0.1
    %460 = vrot.lane.b32.xlu0 %v458, 126
    %v461 = vpop.permute.xlu0 %460
    %463 = vst.msk [vmem:[%s10] sm:$0xff] %vm437, %v461
    // Predicated region
    $region50: #{tpu_custom_call.1} parent=1 // pred_check
      _
    $region51: #{tpu_custom_call.1} parent=1 // pred_check_branch
      %465 = sbr.rel (0) target = $region53
    $region52: #{tpu_custom_call.1} parent=1 // pred_region
      _
    $region53: #{tpu_custom_call.1} parent=1 // pred_fallthru
      _
    // Predicated region
    $region54: #{tpu_custom_call.1} parent=1 // pred_check
      _
    $region55: #{tpu_custom_call.1} parent=1 // pred_check_branch
      %467 = sbr.rel (0) target = $region57
    $region56: #{tpu_custom_call.1} parent=1 // pred_region
      _
    $region57: #{tpu_custom_call.1} parent=1 // pred_fallthru
      _
    // Predicated region
    $region58: #{tpu_custom_call.1} parent=1 // pred_check
      _
    $region59: #{tpu_custom_call.1} parent=1 // pred_check_branch
      %469 = sbr.rel (0) target = $region61
    $region60: #{tpu_custom_call.1} parent=1 // pred_region
      _
    $region61: #{tpu_custom_call.1} parent=1 // pred_fallthru
      _
    // Predicated region
    $region62: #{tpu_custom_call.1} parent=1 // pred_check
      _
    $region63: #{tpu_custom_call.1} parent=1 // pred_check_branch
      %471 = sbr.rel (0) target = $region65
    $region64: #{tpu_custom_call.1} parent=1 // pred_region
      _
    $region65: #{tpu_custom_call.1} parent=1 // pred_fallthru
      _
    %472 = vsyncpa [#allocation3], 1
    %473 = vsyncpa [#allocation5], 1

</llo_original>
